<compile_context>
chip_gen: v7x
topology: tpu7x:2x2x1
jax: 0.10.0
libtpu: 0.0.40
codegen_flags: <defaults>
</compile_context>

<pallas_src>
import jax
import jax.numpy as jnp
from jax.experimental import pallas as pl
from jax.experimental.pallas import tpu as pltpu


def multitask_kernel(xs_ref, w1x_ref, w1s_ref, b1_ref,
                     w2_ref, b2_ref, w3_ref, b3_ref,
                     wh_ref, bh_ref, out_ref):
    F = w1x_ref.shape[0]
    xs = xs_ref[...]                     # (TB, 2F): [x | s] packed
    x = xs[:, :F]
    s = xs[:, F:]

    # MaskLayer1d(value=0, append=True) fused into the first Linear:
    #   concat(x*s, s) @ [W1x; W1s] == (x*s) @ W1x + s @ W1s
    xm = x * s
    h = (jnp.dot(xm, w1x_ref[...], preferred_element_type=jnp.float32)
         + jnp.dot(s, w1s_ref[...], preferred_element_type=jnp.float32)
         + b1_ref[...])
    h = jnp.maximum(h, 0.0)

    h = jnp.dot(h, w2_ref[...], preferred_element_type=jnp.float32) + b2_ref[...]
    h = jnp.maximum(h, 0.0)

    h = jnp.dot(h, w3_ref[...], preferred_element_type=jnp.float32) + b3_ref[...]
    h = jnp.maximum(h, 0.0)

    # Fused heads: one (TB, 4) store instead of two (TB, 2) masked stores.
    out_ref[...] = (jnp.dot(h, wh_ref[...], preferred_element_type=jnp.float32)
                    + bh_ref[...]).astype(out_ref.dtype)


def _round_up(n, m):
    return ((n + m - 1) // m) * m


def multitask_forward(x, s, params, *, tb=256):
    """x, s: (B, F) float32. params: dict of weights (features-last layout).

    tb is the batch tile (multiple of 8 sublanes); sweep 256-512 for large
    fastshap mask batches. The batch is zero-padded up to a tile multiple and
    the padded rows are sliced off after the kernel.
    """
    B, F = x.shape

    # Fuse the two 2-wide heads into a single 4-wide head.
    wh = jnp.concatenate([params["wh1"], params["wh2"]], axis=1)   # (H, 4)
    bh = jnp.concatenate([params["bh1"], params["bh2"]], axis=1)   # (1, 4)

    # Pack x and s into one (B, 2F) operand: single input DMA stream.
    xs = jnp.concatenate([x, s], axis=1)

    # Batch tile: multiple of 8; pad batch up to a tile multiple.
    tb = max(8, min(tb, _round_up(B, 8)))
    Bp = _round_up(B, tb)
    if Bp != B:
        xs = jnp.pad(xs, ((0, Bp - B), (0, 0)))

    n_out = wh.shape[1]
    args = (xs,
            params["w1x"], params["w1s"], params["b1"],
            params["w2"], params["b2"],
            params["w3"], params["b3"],
            wh, bh)

    # Weights/biases: full-array blocks with constant index_map -> DMA'd once,
    # VMEM-resident across all batch grid steps.
    def resident(a):
        return pl.BlockSpec(a.shape, lambda i: (0,) * a.ndim)

    in_specs = ([pl.BlockSpec((tb, xs.shape[1]), lambda i: (i, 0))]
                + [resident(a) for a in args[1:]])

    out = pl.pallas_call(
        multitask_kernel,
        out_shape=jax.ShapeDtypeStruct((Bp, n_out), jnp.float32),
        grid=(Bp // tb,),
        in_specs=in_specs,
        out_specs=pl.BlockSpec((tb, n_out), lambda i: (i, 0)),
        compiler_params=pltpu.CompilerParams(
            dimension_semantics=("parallel",)),  # megacore sharding on v7x
    )(*args)

    out = out[:B]
    return out[:, :2], out[:, 2:]


def init_params(key, num_features, layer_size):
    """Deterministic synthetic parameters (shapes from MultiTaskModel.__init__)."""
    ks = jax.random.split(key, 10)
    # nn.Linear(2*F, H) weight has shape (H, 2*F); we store the transpose and
    # split its input dim into the x-part (first F rows) and S-part (last F rows).
    w1 = jax.random.normal(ks[0], (2 * num_features, layer_size), jnp.float32) * 0.1
    return {
        "w1x": w1[:num_features],
        "w1s": w1[num_features:],
        "b1": jax.random.normal(ks[1], (1, layer_size), jnp.float32) * 0.1,
        "w2": jax.random.normal(ks[2], (layer_size, layer_size), jnp.float32) * 0.1,
        "b2": jax.random.normal(ks[3], (1, layer_size), jnp.float32) * 0.1,
        "w3": jax.random.normal(ks[4], (layer_size, layer_size), jnp.float32) * 0.1,
        "b3": jax.random.normal(ks[5], (1, layer_size), jnp.float32) * 0.1,
        "wh1": jax.random.normal(ks[6], (layer_size, 2), jnp.float32) * 0.1,
        "bh1": jax.random.normal(ks[7], (1, 2), jnp.float32) * 0.1,
        "wh2": jax.random.normal(ks[8], (layer_size, 2), jnp.float32) * 0.1,
        "bh2": jax.random.normal(ks[9], (1, 2), jnp.float32) * 0.1,
    }


def reference_forward(x, s, p):
    """Pure-JAX reference of the PyTorch forward."""
    h0 = jnp.concatenate([x * s, s], axis=1)
    w1 = jnp.concatenate([p["w1x"], p["w1s"]], axis=0)
    h = jax.nn.relu(h0 @ w1 + p["b1"])
    h = jax.nn.relu(h @ p["w2"] + p["b2"])
    h = jax.nn.relu(h @ p["w3"] + p["b3"])
    return h @ p["wh1"] + p["bh1"], h @ p["wh2"] + p["bh2"]


if __name__ == "__main__":
    num_features = 16   # len(feature_names)
    layer_size = 32     # Layer_size
    batch = 28          # not a multiple of the batch tile -> exercises padding

    key = jax.random.PRNGKey(0)
    kx, ks_, kp = jax.random.split(key, 3)
    x = jax.random.normal(kx, (batch, num_features), jnp.float32)
    # MaskLayer1d mask S: binary subset-indicator
    s = (jax.random.uniform(ks_, (batch, num_features)) > 0.5).astype(jnp.float32)

    params = init_params(kp, num_features, layer_size)

    # Small batch tile here so the batch grid (4 steps) is actually exercised;
    # for real fastshap mask batches use the default tb=256 (or sweep to 512).
    v1, v2 = multitask_forward(x, s, params, tb=8)
    jax.block_until_ready((v1, v2))

    r1, r2 = reference_forward(x, s, params)
    assert jnp.allclose(v1, r1, atol=1e-5, rtol=1e-5)
    assert jnp.allclose(v2, r2, atol=1e-5, rtol=1e-5)
    assert v1.shape == (batch, 2) and v2.shape == (batch, 2)

    print("KERNEL_OK")
</pallas_src>

<mosaic_0001>
module attributes {stable_mosaic.version = 11 : i64} {
  func.func @multitask_kernel(%arg0: i32, %arg1: memref<8x32xf32, #tpu.memory_space<vmem>>, %arg2: memref<16x32xf32, #tpu.memory_space<vmem>>, %arg3: memref<16x32xf32, #tpu.memory_space<vmem>>, %arg4: memref<1x32xf32, #tpu.memory_space<vmem>>, %arg5: memref<32x32xf32, #tpu.memory_space<vmem>>, %arg6: memref<1x32xf32, #tpu.memory_space<vmem>>, %arg7: memref<32x32xf32, #tpu.memory_space<vmem>>, %arg8: memref<1x32xf32, #tpu.memory_space<vmem>>, %arg9: memref<32x4xf32, #tpu.memory_space<vmem>>, %arg10: memref<1x4xf32, #tpu.memory_space<vmem>>, %arg11: memref<8x4xf32, #tpu.memory_space<vmem>>) attributes {dimension_semantics = [#tpu.dimension_semantics<parallel>], iteration_bounds = array<i64: 4>, scalar_prefetch = 0 : i64, scratch_operands = 0 : i64, tpu.core_type = #tpu.core_type<tc>, window_params = [{transform_indices = @transform_0, window_bounds = array<i64: 8, 32>}, {pipeline_mode = #tpu.pipeline_mode<synchronous>, transform_indices = @transform_1, window_bounds = array<i64: 16, 32>}, {pipeline_mode = #tpu.pipeline_mode<synchronous>, transform_indices = @transform_2, window_bounds = array<i64: 16, 32>}, {pipeline_mode = #tpu.pipeline_mode<synchronous>, transform_indices = @transform_3, window_bounds = array<i64: 1, 32>}, {pipeline_mode = #tpu.pipeline_mode<synchronous>, transform_indices = @transform_4, window_bounds = array<i64: 32, 32>}, {pipeline_mode = #tpu.pipeline_mode<synchronous>, transform_indices = @transform_5, window_bounds = array<i64: 1, 32>}, {pipeline_mode = #tpu.pipeline_mode<synchronous>, transform_indices = @transform_6, window_bounds = array<i64: 32, 32>}, {pipeline_mode = #tpu.pipeline_mode<synchronous>, transform_indices = @transform_7, window_bounds = array<i64: 1, 32>}, {pipeline_mode = #tpu.pipeline_mode<synchronous>, transform_indices = @transform_8, window_bounds = array<i64: 32, 4>}, {pipeline_mode = #tpu.pipeline_mode<synchronous>, transform_indices = @transform_9, window_bounds = array<i64: 1, 4>}, {transform_indices = @transform_10, window_bounds = array<i64: 8, 4>}]} {
    %c0 = arith.constant 0 : index
    %c0_0 = arith.constant 0 : index
    %0 = vector.load %arg1[%c0, %c0_0] : memref<8x32xf32, #tpu.memory_space<vmem>>, vector<8x32xf32>
    %1 = vector.extract_strided_slice %0 {offsets = [0, 0], sizes = [8, 16], strides = [1, 1]} : vector<8x32xf32> to vector<8x16xf32>
    %2 = vector.extract_strided_slice %0 {offsets = [0, 16], sizes = [8, 16], strides = [1, 1]} : vector<8x32xf32> to vector<8x16xf32>
    %3 = arith.mulf %1, %2 : vector<8x16xf32>
    %c0_1 = arith.constant 0 : index
    %c0_2 = arith.constant 0 : index
    %4 = vector.load %arg2[%c0_1, %c0_2] : memref<16x32xf32, #tpu.memory_space<vmem>>, vector<16x32xf32>
    %cst = arith.constant dense<0.000000e+00> : vector<8x32xf32>
    %5 = tpu.matmul %3, %4, %cst {dimension_numbers = #tpu.dot_dimension_numbers<[1], [0], [0], [1], [0, 0, 1, 1], [], []>} : vector<8x16xf32>, vector<16x32xf32>, vector<8x32xf32> -> vector<8x32xf32>
    %c0_3 = arith.constant 0 : index
    %c0_4 = arith.constant 0 : index
    %6 = vector.load %arg3[%c0_3, %c0_4] : memref<16x32xf32, #tpu.memory_space<vmem>>, vector<16x32xf32>
    %cst_5 = arith.constant dense<0.000000e+00> : vector<8x32xf32>
    %7 = tpu.matmul %2, %6, %cst_5 {dimension_numbers = #tpu.dot_dimension_numbers<[1], [0], [0], [1], [0, 0, 1, 1], [], []>} : vector<8x16xf32>, vector<16x32xf32>, vector<8x32xf32> -> vector<8x32xf32>
    %8 = arith.addf %5, %7 : vector<8x32xf32>
    %c0_6 = arith.constant 0 : index
    %c0_7 = arith.constant 0 : index
    %9 = vector.load %arg4[%c0_6, %c0_7] : memref<1x32xf32, #tpu.memory_space<vmem>>, vector<1x32xf32>
    %10 = vector.broadcast %9 : vector<1x32xf32> to vector<8x32xf32>
    %11 = arith.addf %8, %10 : vector<8x32xf32>
    %cst_8 = arith.constant 0.000000e+00 : f32
    %12 = vector.broadcast %cst_8 : f32 to vector<8x32xf32>
    %13 = arith.maximumf %11, %12 : vector<8x32xf32>
    %c0_9 = arith.constant 0 : index
    %c0_10 = arith.constant 0 : index
    %14 = vector.load %arg5[%c0_9, %c0_10] : memref<32x32xf32, #tpu.memory_space<vmem>>, vector<32x32xf32>
    %cst_11 = arith.constant dense<0.000000e+00> : vector<8x32xf32>
    %15 = tpu.matmul %13, %14, %cst_11 {dimension_numbers = #tpu.dot_dimension_numbers<[1], [0], [0], [1], [0, 0, 1, 1], [], []>} : vector<8x32xf32>, vector<32x32xf32>, vector<8x32xf32> -> vector<8x32xf32>
    %c0_12 = arith.constant 0 : index
    %c0_13 = arith.constant 0 : index
    %16 = vector.load %arg6[%c0_12, %c0_13] : memref<1x32xf32, #tpu.memory_space<vmem>>, vector<1x32xf32>
    %17 = vector.broadcast %16 : vector<1x32xf32> to vector<8x32xf32>
    %18 = arith.addf %15, %17 : vector<8x32xf32>
    %cst_14 = arith.constant 0.000000e+00 : f32
    %19 = vector.broadcast %cst_14 : f32 to vector<8x32xf32>
    %20 = arith.maximumf %18, %19 : vector<8x32xf32>
    %c0_15 = arith.constant 0 : index
    %c0_16 = arith.constant 0 : index
    %21 = vector.load %arg7[%c0_15, %c0_16] : memref<32x32xf32, #tpu.memory_space<vmem>>, vector<32x32xf32>
    %cst_17 = arith.constant dense<0.000000e+00> : vector<8x32xf32>
    %22 = tpu.matmul %20, %21, %cst_17 {dimension_numbers = #tpu.dot_dimension_numbers<[1], [0], [0], [1], [0, 0, 1, 1], [], []>} : vector<8x32xf32>, vector<32x32xf32>, vector<8x32xf32> -> vector<8x32xf32>
    %c0_18 = arith.constant 0 : index
    %c0_19 = arith.constant 0 : index
    %23 = vector.load %arg8[%c0_18, %c0_19] : memref<1x32xf32, #tpu.memory_space<vmem>>, vector<1x32xf32>
    %24 = vector.broadcast %23 : vector<1x32xf32> to vector<8x32xf32>
    %25 = arith.addf %22, %24 : vector<8x32xf32>
    %cst_20 = arith.constant 0.000000e+00 : f32
    %26 = vector.broadcast %cst_20 : f32 to vector<8x32xf32>
    %27 = arith.maximumf %25, %26 : vector<8x32xf32>
    %c0_21 = arith.constant 0 : index
    %c0_22 = arith.constant 0 : index
    %28 = vector.load %arg9[%c0_21, %c0_22] : memref<32x4xf32, #tpu.memory_space<vmem>>, vector<32x4xf32>
    %cst_23 = arith.constant dense<0.000000e+00> : vector<8x4xf32>
    %29 = tpu.matmul %27, %28, %cst_23 {dimension_numbers = #tpu.dot_dimension_numbers<[1], [0], [0], [1], [0, 0, 1, 1], [], []>} : vector<8x32xf32>, vector<32x4xf32>, vector<8x4xf32> -> vector<8x4xf32>
    %c0_24 = arith.constant 0 : index
    %c0_25 = arith.constant 0 : index
    %30 = vector.load %arg10[%c0_24, %c0_25] : memref<1x4xf32, #tpu.memory_space<vmem>>, vector<1x4xf32>
    %31 = vector.broadcast %30 : vector<1x4xf32> to vector<8x4xf32>
    %32 = arith.addf %29, %31 : vector<8x4xf32>
    %c0_26 = arith.constant 0 : index
    %c0_27 = arith.constant 0 : index
    %33 = vector.load %arg11[%c0_26, %c0_27] : memref<8x4xf32, #tpu.memory_space<vmem>>, vector<8x4xf32>
    tpu.vector_store %arg11[%c0_26, %c0_27], %32 {strides = array<i32>} : memref<8x4xf32, #tpu.memory_space<vmem>>, vector<8x4xf32>,
    return
  }
  func.func @transform_0(%arg0: i32) -> (i32, i32) {
    %c0_i32 = arith.constant 0 : i32
    %c0_i32_0 = arith.constant 0 : i32
    return %arg0, %c0_i32 : i32, i32
  }
  func.func @transform_1(%arg0: i32) -> (i32, i32) {
    %c0_i32 = arith.constant 0 : i32
    %c0_i32_0 = arith.constant 0 : i32
    %c0_i32_1 = arith.constant 0 : i32
    return %c0_i32, %c0_i32_0 : i32, i32
  }
  func.func @transform_2(%arg0: i32) -> (i32, i32) {
    %c0_i32 = arith.constant 0 : i32
    %c0_i32_0 = arith.constant 0 : i32
    %c0_i32_1 = arith.constant 0 : i32
    return %c0_i32, %c0_i32_0 : i32, i32
  }
  func.func @transform_3(%arg0: i32) -> (i32, i32) {
    %c0_i32 = arith.constant 0 : i32
    %c0_i32_0 = arith.constant 0 : i32
    %c0_i32_1 = arith.constant 0 : i32
    return %c0_i32, %c0_i32_0 : i32, i32
  }
  func.func @transform_4(%arg0: i32) -> (i32, i32) {
    %c0_i32 = arith.constant 0 : i32
    %c0_i32_0 = arith.constant 0 : i32
    %c0_i32_1 = arith.constant 0 : i32
    return %c0_i32, %c0_i32_0 : i32, i32
  }
  func.func @transform_5(%arg0: i32) -> (i32, i32) {
    %c0_i32 = arith.constant 0 : i32
    %c0_i32_0 = arith.constant 0 : i32
    %c0_i32_1 = arith.constant 0 : i32
    return %c0_i32, %c0_i32_0 : i32, i32
  }
  func.func @transform_6(%arg0: i32) -> (i32, i32) {
    %c0_i32 = arith.constant 0 : i32
    %c0_i32_0 = arith.constant 0 : i32
    %c0_i32_1 = arith.constant 0 : i32
    return %c0_i32, %c0_i32_0 : i32, i32
  }
  func.func @transform_7(%arg0: i32) -> (i32, i32) {
    %c0_i32 = arith.constant 0 : i32
    %c0_i32_0 = arith.constant 0 : i32
    %c0_i32_1 = arith.constant 0 : i32
    return %c0_i32, %c0_i32_0 : i32, i32
  }
  func.func @transform_8(%arg0: i32) -> (i32, i32) {
    %c0_i32 = arith.constant 0 : i32
    %c0_i32_0 = arith.constant 0 : i32
    %c0_i32_1 = arith.constant 0 : i32
    return %c0_i32, %c0_i32_0 : i32, i32
  }
  func.func @transform_9(%arg0: i32) -> (i32, i32) {
    %c0_i32 = arith.constant 0 : i32
    %c0_i32_0 = arith.constant 0 : i32
    %c0_i32_1 = arith.constant 0 : i32
    return %c0_i32, %c0_i32_0 : i32, i32
  }
  func.func @transform_10(%arg0: i32) -> (i32, i32) {
    %c0_i32 = arith.constant 0 : i32
    %c0_i32_0 = arith.constant 0 : i32
    return %arg0, %c0_i32 : i32, i32
  }
}

</mosaic_0001>

<llo_original>
// kernel: tpu_custom_call.1
$region0: #{tpu_custom_call.1}
  #allocation0 [shape = 'u32[]', space=smem, size = 0x4, offset = 0x4, fixed_abs, tag = 'smem constant byte address 0x4 - core index']
  #allocation1 [shape = 'u32[144,128]{1,0:T(1,128)}', space=vmem, size = 0x12000, scoped, tag = 'internal scratch']
  %s0 = inlined_call_operand.vmem [shape: f32[32,32], index: 0, kind: input, shape index: {}]
  %s1 = inlined_call_operand.hbm [shape: f32[16,32], index: 1, kind: input, shape index: {}]
  %s2 = inlined_call_operand.hbm [shape: f32[16,32], index: 2, kind: input, shape index: {}]
  %s3 = inlined_call_operand.vmem [shape: f32[1,32], index: 3, kind: input, shape index: {}]
  %s4 = inlined_call_operand.hbm [shape: f32[32,32], index: 4, kind: input, shape index: {}]
  %s5 = inlined_call_operand.vmem [shape: f32[1,32], index: 5, kind: input, shape index: {}]
  %s6 = inlined_call_operand.hbm [shape: f32[32,32], index: 6, kind: input, shape index: {}]
  %s7 = inlined_call_operand.vmem [shape: f32[1,32], index: 7, kind: input, shape index: {}]
  %s8 = inlined_call_operand.vmem [shape: f32[32,4], index: 8, kind: input, shape index: {}]
  %s9 = inlined_call_operand.vmem [shape: f32[1,4], index: 9, kind: input, shape index: {}]
  %s10 = inlined_call_operand.vmem [shape: f32[32,4], index: 10, kind: output, shape index: {}]
  %s11 = sld [smem:[#allocation0]]
  $region89: #{tpu_custom_call.1} parent=0
    _
  %s13 = ssub.s32 1, %s11
  %s14 = scalar_select 0, %s13, %s11
  $region1: #{tpu_custom_call.1} parent=0
    #allocation2 [shape = 'u8[8192]{0}', space=vmem, size = 0x2000, scoped, tag = 'input window, operand 1, single buffered']
    #allocation3 [shape = 's32[2]{0}', space=sflag, size = 0x8, scoped, tag = 'scoped memory for tpu_custom_call.1']
    #allocation4 [shape = 'u8[8192]{0}', space=vmem, size = 0x2000, scoped, tag = 'input window, operand 2, single buffered']
    #allocation5 [shape = 's32[1]{0}', space=sflag, size = 0x4, scoped, tag = 'scoped memory for tpu_custom_call.1']
    #allocation6 [shape = 'u8[16384]{0}', space=vmem, size = 0x4000, scoped, tag = 'input window, operand 4, single buffered']
    #allocation7 [shape = 'u8[16384]{0}', space=vmem, size = 0x4000, scoped, tag = 'input window, operand 6, single buffered']
    #allocation8 [shape = 's32[1]{0}', space=sflag, size = 0x4, scoped, tag = 'scoped memory for tpu_custom_call.1']
    %15 = vsyncpa [#allocation3], 0
    %16 = vsyncpa [#allocation5], 0
    %17 = vsyncpa [#allocation8], 0
    loop: start=0, step=1, limit=6
    $region2: #{tpu_custom_call.1} parent=1 // loop_pre_header
      _
    $region3: #{tpu_custom_call.1} parent=1 // loop_header
      %s19 = sphi 0, %s23
      %p20 = scmp.ge.s32.totalorder %s19, 6
      %s29 = sphi 0, %s31
      %s32 = sphi 0, %s29
      %s33 = sphi 0, %s32
      %s49 = sphi 0, %s33
      %s53 = sphi 0, %s53
      %s55 = sphi 0, %s53
      %s56 = sphi 0, %s55
      %s70 = sphi 0, %s56
      %s74 = sphi 0, %s74
      %s76 = sphi 0, %s74
      %s77 = sphi 0, %s76
      %s91 = sphi 0, %s77
      %s95 = sphi 0, %s95
      %s97 = sphi 0, %s95
      %s98 = sphi 0, %s97
      %s112 = sphi 0, %s98
      %s116 = sphi 0, %s116
      %s118 = sphi 0, %s116
      %s119 = sphi 0, %s118
      %s133 = sphi 0, %s119
      %s137 = sphi 0, %s137
      %s139 = sphi 0, %s137
      %s140 = sphi 0, %s139
      %s154 = sphi 0, %s140
      %s158 = sphi 0, %s158
      %s160 = sphi 0, %s158
      %s161 = sphi 0, %s160
      %s175 = sphi 0, %s161
      %s179 = sphi 0, %s179
      %s181 = sphi 0, %s179
      %s182 = sphi 0, %s181
      %s196 = sphi 0, %s182
      %s200 = sphi 0, %s200
      %s202 = sphi 0, %s200
      %s203 = sphi 0, %s202
      %s217 = sphi 0, %s203
      %s221 = sphi 0, %s221
      %s223 = sphi 0, %s221
      %s224 = sphi 0, %s223
      %s238 = sphi 0, %s224
      %s244 = sphi 0, %s246
      %s247 = sphi 0, %s244
      %s248 = sphi 0, %s247
      %s264 = sphi 0, %s248
    $region4: #{tpu_custom_call.1} parent=1 // loop_header_branch
      %22 = sbr.rel (%p20) target = $region8
    $region5: #{tpu_custom_call.1} parent=1 // loop_body
      %s24 = ssub.s32 %s19, 1
      %s25 = ssub.s32 %s19, 2
      %s26 = sadd.s32 %s19, 1
      %s27 = ssub.s32 %s19, %s26
      %p28 = scmp.eq.s32.totalorder %s27, 0
      %s30 = sadd.s32 %s29, 1
      %s31 = scalar_select %p28, %s29, %s30
      %p34 = pneg %p28
      %p35 = scmp.eq.s32.totalorder %s19, 3
      %p36 = por %p34, %p35
      %p37 = scmp.ne.s32.totalorder %s29, %s32
      %p38 = scmp.eq.s32.totalorder %s19, 0
      %p39 = por %p37, %p38
      %p40 = scmp.ne.s32.totalorder %s29, %s32
      %p41 = scmp.eq.s32.totalorder %s24, 3
      %p42 = por %p40, %p41
      %p43 = scmp.ne.s32.totalorder %s32, %s33
      %p44 = scmp.eq.s32.totalorder %s24, 0
      %p45 = por %p43, %p44
      %p46 = scmp.ne.s32.totalorder %s32, %s33
      %p47 = scmp.eq.s32.totalorder %s25, 3
      %p48 = por %p46, %p47
      %p50 = scmp.ne.s32.totalorder %s33, %s49
      %p51 = scmp.eq.s32.totalorder %s25, 0
      %p52 = por %p50, %p51
      %s54 = sadd.s32 %s53, 1
      %p57 = scmp.eq.s32.totalorder %s19, 3
      %p58 = scmp.ne.s32.totalorder %s53, %s55
      %p59 = scmp.eq.s32.totalorder %s19, 0
      %p60 = por %p58, %p59
      %p61 = scmp.ne.s32.totalorder %s53, %s55
      %p62 = scmp.eq.s32.totalorder %s24, 3
      %p63 = por %p61, %p62
      %p64 = scmp.ne.s32.totalorder %s55, %s56
      %p65 = scmp.eq.s32.totalorder %s24, 0
      %p66 = por %p64, %p65
      %p67 = scmp.ne.s32.totalorder %s55, %s56
      %p68 = scmp.eq.s32.totalorder %s25, 3
      %p69 = por %p67, %p68
      %p71 = scmp.ne.s32.totalorder %s56, %s70
      %p72 = scmp.eq.s32.totalorder %s25, 0
      %p73 = por %p71, %p72
      %s75 = sadd.s32 %s74, 1
      %p78 = scmp.eq.s32.totalorder %s19, 3
      %p79 = scmp.ne.s32.totalorder %s74, %s76
      %p80 = scmp.eq.s32.totalorder %s19, 0
      %p81 = por %p79, %p80
      %p82 = scmp.ne.s32.totalorder %s74, %s76
      %p83 = scmp.eq.s32.totalorder %s24, 3
      %p84 = por %p82, %p83
      %p85 = scmp.ne.s32.totalorder %s76, %s77
      %p86 = scmp.eq.s32.totalorder %s24, 0
      %p87 = por %p85, %p86
      %p88 = scmp.ne.s32.totalorder %s76, %s77
      %p89 = scmp.eq.s32.totalorder %s25, 3
      %p90 = por %p88, %p89
      %p92 = scmp.ne.s32.totalorder %s77, %s91
      %p93 = scmp.eq.s32.totalorder %s25, 0
      %p94 = por %p92, %p93
      %s96 = sadd.s32 %s95, 1
      %p99 = scmp.eq.s32.totalorder %s19, 3
      %p100 = scmp.ne.s32.totalorder %s95, %s97
      %p101 = scmp.eq.s32.totalorder %s19, 0
      %p102 = por %p100, %p101
      %p103 = scmp.ne.s32.totalorder %s95, %s97
      %p104 = scmp.eq.s32.totalorder %s24, 3
      %p105 = por %p103, %p104
      %p106 = scmp.ne.s32.totalorder %s97, %s98
      %p107 = scmp.eq.s32.totalorder %s24, 0
      %p108 = por %p106, %p107
      %p109 = scmp.ne.s32.totalorder %s97, %s98
      %p110 = scmp.eq.s32.totalorder %s25, 3
      %p111 = por %p109, %p110
      %p113 = scmp.ne.s32.totalorder %s98, %s112
      %p114 = scmp.eq.s32.totalorder %s25, 0
      %p115 = por %p113, %p114
      %s117 = sadd.s32 %s116, 1
      %p120 = scmp.eq.s32.totalorder %s19, 3
      %p121 = scmp.ne.s32.totalorder %s116, %s118
      %p122 = scmp.eq.s32.totalorder %s19, 0
      %p123 = por %p121, %p122
      %p124 = scmp.ne.s32.totalorder %s116, %s118
      %p125 = scmp.eq.s32.totalorder %s24, 3
      %p126 = por %p124, %p125
      %p127 = scmp.ne.s32.totalorder %s118, %s119
      %p128 = scmp.eq.s32.totalorder %s24, 0
      %p129 = por %p127, %p128
      %p130 = scmp.ne.s32.totalorder %s118, %s119
      %p131 = scmp.eq.s32.totalorder %s25, 3
      %p132 = por %p130, %p131
      %p134 = scmp.ne.s32.totalorder %s119, %s133
      %p135 = scmp.eq.s32.totalorder %s25, 0
      %p136 = por %p134, %p135
      %s138 = sadd.s32 %s137, 1
      %p141 = scmp.eq.s32.totalorder %s19, 3
      %p142 = scmp.ne.s32.totalorder %s137, %s139
      %p143 = scmp.eq.s32.totalorder %s19, 0
      %p144 = por %p142, %p143
      %p145 = scmp.ne.s32.totalorder %s137, %s139
      %p146 = scmp.eq.s32.totalorder %s24, 3
      %p147 = por %p145, %p146
      %p148 = scmp.ne.s32.totalorder %s139, %s140
      %p149 = scmp.eq.s32.totalorder %s24, 0
      %p150 = por %p148, %p149
      %p151 = scmp.ne.s32.totalorder %s139, %s140
      %p152 = scmp.eq.s32.totalorder %s25, 3
      %p153 = por %p151, %p152
      %p155 = scmp.ne.s32.totalorder %s140, %s154
      %p156 = scmp.eq.s32.totalorder %s25, 0
      %p157 = por %p155, %p156
      %s159 = sadd.s32 %s158, 1
      %p162 = scmp.eq.s32.totalorder %s19, 3
      %p163 = scmp.ne.s32.totalorder %s158, %s160
      %p164 = scmp.eq.s32.totalorder %s19, 0
      %p165 = por %p163, %p164
      %p166 = scmp.ne.s32.totalorder %s158, %s160
      %p167 = scmp.eq.s32.totalorder %s24, 3
      %p168 = por %p166, %p167
      %p169 = scmp.ne.s32.totalorder %s160, %s161
      %p170 = scmp.eq.s32.totalorder %s24, 0
      %p171 = por %p169, %p170
      %p172 = scmp.ne.s32.totalorder %s160, %s161
      %p173 = scmp.eq.s32.totalorder %s25, 3
      %p174 = por %p172, %p173
      %p176 = scmp.ne.s32.totalorder %s161, %s175
      %p177 = scmp.eq.s32.totalorder %s25, 0
      %p178 = por %p176, %p177
      %s180 = sadd.s32 %s179, 1
      %p183 = scmp.eq.s32.totalorder %s19, 3
      %p184 = scmp.ne.s32.totalorder %s179, %s181
      %p185 = scmp.eq.s32.totalorder %s19, 0
      %p186 = por %p184, %p185
      %p187 = scmp.ne.s32.totalorder %s179, %s181
      %p188 = scmp.eq.s32.totalorder %s24, 3
      %p189 = por %p187, %p188
      %p190 = scmp.ne.s32.totalorder %s181, %s182
      %p191 = scmp.eq.s32.totalorder %s24, 0
      %p192 = por %p190, %p191
      %p193 = scmp.ne.s32.totalorder %s181, %s182
      %p194 = scmp.eq.s32.totalorder %s25, 3
      %p195 = por %p193, %p194
      %p197 = scmp.ne.s32.totalorder %s182, %s196
      %p198 = scmp.eq.s32.totalorder %s25, 0
      %p199 = por %p197, %p198
      %s201 = sadd.s32 %s200, 1
      %p204 = scmp.eq.s32.totalorder %s19, 3
      %p205 = scmp.ne.s32.totalorder %s200, %s202
      %p206 = scmp.eq.s32.totalorder %s19, 0
      %p207 = por %p205, %p206
      %p208 = scmp.ne.s32.totalorder %s200, %s202
      %p209 = scmp.eq.s32.totalorder %s24, 3
      %p210 = por %p208, %p209
      %p211 = scmp.ne.s32.totalorder %s202, %s203
      %p212 = scmp.eq.s32.totalorder %s24, 0
      %p213 = por %p211, %p212
      %p214 = scmp.ne.s32.totalorder %s202, %s203
      %p215 = scmp.eq.s32.totalorder %s25, 3
      %p216 = por %p214, %p215
      %p218 = scmp.ne.s32.totalorder %s203, %s217
      %p219 = scmp.eq.s32.totalorder %s25, 0
      %p220 = por %p218, %p219
      %s222 = sadd.s32 %s221, 1
      %p225 = scmp.eq.s32.totalorder %s19, 3
      %p226 = scmp.ne.s32.totalorder %s221, %s223
      %p227 = scmp.eq.s32.totalorder %s19, 0
      %p228 = por %p226, %p227
      %p229 = scmp.ne.s32.totalorder %s221, %s223
      %p230 = scmp.eq.s32.totalorder %s24, 3
      %p231 = por %p229, %p230
      %p232 = scmp.ne.s32.totalorder %s223, %s224
      %p233 = scmp.eq.s32.totalorder %s24, 0
      %p234 = por %p232, %p233
      %p235 = scmp.ne.s32.totalorder %s223, %s224
      %p236 = scmp.eq.s32.totalorder %s25, 3
      %p237 = por %p235, %p236
      %p239 = scmp.ne.s32.totalorder %s224, %s238
      %p240 = scmp.eq.s32.totalorder %s25, 0
      %p241 = por %p239, %p240
      %s242 = ssub.s32 %s19, %s26
      %p243 = scmp.eq.s32.totalorder %s242, 0
      %s245 = sadd.s32 %s244, 1
      %s246 = scalar_select %p243, %s244, %s245
      %p249 = pneg %p243
      %p250 = scmp.eq.s32.totalorder %s19, 3
      %p251 = por %p249, %p250
      %p252 = scmp.ne.s32.totalorder %s244, %s247
      %p253 = scmp.eq.s32.totalorder %s19, 0
      %p254 = por %p252, %p253
      %p255 = scmp.ne.s32.totalorder %s244, %s247
      %p256 = scmp.eq.s32.totalorder %s24, 3
      %p257 = por %p255, %p256
      %p258 = scmp.ne.s32.totalorder %s247, %s248
      %p259 = scmp.eq.s32.totalorder %s24, 0
      %p260 = por %p258, %p259
      %p261 = scmp.ne.s32.totalorder %s247, %s248
      %p262 = scmp.eq.s32.totalorder %s25, 3
      %p263 = por %p261, %p262
      %p265 = scmp.ne.s32.totalorder %s248, %s264
      %p266 = scmp.eq.s32.totalorder %s25, 0
      %p267 = por %p265, %p266
      %p268 = scmp.le.s32.totalorder 1, %s19
      %p269 = scmp.lt.s32.totalorder %s19, 5
      %p270 = pnand %p268, %p269
      %p271 = pneg %p270
      // Predicated region
      $region9: #{tpu_custom_call.1} parent=5 // pred_check
        _
      $region10: #{tpu_custom_call.1} parent=5 // pred_check_branch
        %273 = sbr.rel (%p270) target = $region12
      $region11: #{tpu_custom_call.1} parent=5 // pred_region
        %s274 = ssub.s32 %s19, 1
        // Predicated region
        $region13: #{tpu_custom_call.1} parent=11 // pred_check
          %p275 = pneg %p66
        $region14: #{tpu_custom_call.1} parent=11 // pred_check_branch
          %277 = sbr.rel (%p275) target = $region16
        $region15: #{tpu_custom_call.1} parent=11 // pred_region
          %s279 = ssub.s32 256, 256
          %280 = vsyncadd [#allocation3], %s279
          %s281 = sshll.u32 [#allocation2], 4
          %s282 = int_to_ptr.vmem [resolvable:$true] %s281
          %287 = dma.hbm_to_vmem [thread:$0]  %s1, 256, %s282, [#allocation3], 128, 128, 8
        $region16: #{tpu_custom_call.1} parent=11 // pred_fallthru
          _
        // Predicated region
        $region17: #{tpu_custom_call.1} parent=11 // pred_check
          %p288 = pneg %p87
        $region18: #{tpu_custom_call.1} parent=11 // pred_check_branch
          %290 = sbr.rel (%p288) target = $region20
        $region19: #{tpu_custom_call.1} parent=11 // pred_region
          %s292 = ssub.s32 256, 256
          %293 = vsyncadd [#allocation5], %s292
          %s294 = sshll.u32 [#allocation4], 4
          %s295 = int_to_ptr.vmem [resolvable:$true] %s294
          %300 = dma.hbm_to_vmem [thread:$0]  %s2, 256, %s295, [#allocation5], 128, 128, 8
        $region20: #{tpu_custom_call.1} parent=11 // pred_fallthru
          _
        // Predicated region
        $region21: #{tpu_custom_call.1} parent=11 // pred_check
          %p301 = pneg %p108
        $region22: #{tpu_custom_call.1} parent=11 // pred_check_branch
          %303 = sbr.rel (%p301) target = $region24
        $region23: #{tpu_custom_call.1} parent=11 // pred_region
          _
        $region24: #{tpu_custom_call.1} parent=11 // pred_fallthru
          _
        // Predicated region
        $region25: #{tpu_custom_call.1} parent=11 // pred_check
          %p304 = pneg %p129
        $region26: #{tpu_custom_call.1} parent=11 // pred_check_branch
          %306 = sbr.rel (%p304) target = $region28
        $region27: #{tpu_custom_call.1} parent=11 // pred_region
          %s308 = ssub.s32 512, 512
          %309 = vsyncadd [#allocation5], %s308
          %s310 = sshll.u32 [#allocation6], 4
          %s311 = int_to_ptr.vmem [resolvable:$true] %s310
          %316 = dma.hbm_to_vmem [thread:$0]  %s4, 512, %s311, [#allocation5], 128, 128, 8
        $region28: #{tpu_custom_call.1} parent=11 // pred_fallthru
          _
        // Predicated region
        $region29: #{tpu_custom_call.1} parent=11 // pred_check
          %p317 = pneg %p150
        $region30: #{tpu_custom_call.1} parent=11 // pred_check_branch
          %319 = sbr.rel (%p317) target = $region32
        $region31: #{tpu_custom_call.1} parent=11 // pred_region
          _
        $region32: #{tpu_custom_call.1} parent=11 // pred_fallthru
          _
        // Predicated region
        $region33: #{tpu_custom_call.1} parent=11 // pred_check
          %p320 = pneg %p171
        $region34: #{tpu_custom_call.1} parent=11 // pred_check_branch
          %322 = sbr.rel (%p320) target = $region36
        $region35: #{tpu_custom_call.1} parent=11 // pred_region
          %s324 = ssub.s32 512, 512
          %325 = vsyncadd [#allocation8], %s324
          %s326 = sshll.u32 [#allocation7], 4
          %s327 = int_to_ptr.vmem [resolvable:$true] %s326
          %332 = dma.hbm_to_vmem [thread:$0]  %s6, 512, %s327, [#allocation8], 128, 128, 8
        $region36: #{tpu_custom_call.1} parent=11 // pred_fallthru
          _
        // Predicated region
        $region37: #{tpu_custom_call.1} parent=11 // pred_check
          %p333 = pneg %p192
        $region38: #{tpu_custom_call.1} parent=11 // pred_check_branch
          %335 = sbr.rel (%p333) target = $region40
        $region39: #{tpu_custom_call.1} parent=11 // pred_region
          _
        $region40: #{tpu_custom_call.1} parent=11 // pred_fallthru
          _
        // Predicated region
        $region41: #{tpu_custom_call.1} parent=11 // pred_check
          %p336 = pneg %p213
        $region42: #{tpu_custom_call.1} parent=11 // pred_check_branch
          %338 = sbr.rel (%p336) target = $region44
        $region43: #{tpu_custom_call.1} parent=11 // pred_region
          _
        $region44: #{tpu_custom_call.1} parent=11 // pred_fallthru
          _
        // Predicated region
        $region45: #{tpu_custom_call.1} parent=11 // pred_check
          %p339 = pneg %p234
        $region46: #{tpu_custom_call.1} parent=11 // pred_check_branch
          %341 = sbr.rel (%p339) target = $region48
        $region47: #{tpu_custom_call.1} parent=11 // pred_region
          _
        $region48: #{tpu_custom_call.1} parent=11 // pred_fallthru
          _
      $region12: #{tpu_custom_call.1} parent=5 // pred_fallthru
        _
      %p342 = scmp.lt.s32.totalorder %s19, 4
      // Predicated region
      $region49: #{tpu_custom_call.1} parent=5 // pred_check
        %p343 = pneg %p342
      $region50: #{tpu_custom_call.1} parent=5 // pred_check_branch
        %345 = sbr.rel (%p343) target = $region52
      $region51: #{tpu_custom_call.1} parent=5 // pred_region
        // Predicated region
        $region53: #{tpu_custom_call.1} parent=51 // pred_check
          %p346 = pneg %p39
        $region54: #{tpu_custom_call.1} parent=51 // pred_check_branch
          %348 = sbr.rel (%p346) target = $region56
        $region55: #{tpu_custom_call.1} parent=51 // pred_region
          %p349 = scmp.lt.s32.totalorder %s19, 3
          %s350 = scalar_select %p349, %s19, 3
          %s351 = smul.addr %s350, 8
          %s352 = scalar_lea.vmem %s0, %s351
        $region56: #{tpu_custom_call.1} parent=51 // pred_fallthru
          _
      $region52: #{tpu_custom_call.1} parent=5 // pred_fallthru
        _
      %p353 = scmp.le.s32.totalorder 1, %s19
      %p354 = scmp.lt.s32.totalorder %s19, 5
      %p355 = pnand %p353, %p354
      %p356 = pneg %p355
      // Predicated region
      $region57: #{tpu_custom_call.1} parent=5 // pred_check
        _
      $region58: #{tpu_custom_call.1} parent=5 // pred_check_branch
        %358 = sbr.rel (%p355) target = $region60
      $region59: #{tpu_custom_call.1} parent=5 // pred_region
        %s359 = ssub.s32 %s19, 1
        // Predicated region
        $region61: #{tpu_custom_call.1} parent=59 // pred_check
          %p360 = pneg %p66
        $region62: #{tpu_custom_call.1} parent=59 // pred_check_branch
          %362 = sbr.rel (%p360) target = $region64
        $region63: #{tpu_custom_call.1} parent=59 // pred_region
          %363 = dma.done [#allocation3], 256
        $region64: #{tpu_custom_call.1} parent=59 // pred_fallthru
          _
        // Predicated region
        $region65: #{tpu_custom_call.1} parent=59 // pred_check
          %p364 = pneg %p87
        $region66: #{tpu_custom_call.1} parent=59 // pred_check_branch
          %366 = sbr.rel (%p364) target = $region68
        $region67: #{tpu_custom_call.1} parent=59 // pred_region
          %367 = dma.done [#allocation5], 256
        $region68: #{tpu_custom_call.1} parent=59 // pred_fallthru
          _
        // Predicated region
        $region69: #{tpu_custom_call.1} parent=59 // pred_check
          %p368 = pneg %p129
        $region70: #{tpu_custom_call.1} parent=59 // pred_check_branch
          %370 = sbr.rel (%p368) target = $region72
        $region71: #{tpu_custom_call.1} parent=59 // pred_region
          %371 = dma.done [#allocation5], 512
        $region72: #{tpu_custom_call.1} parent=59 // pred_fallthru
          _
        // Predicated region
        $region73: #{tpu_custom_call.1} parent=59 // pred_check
          %p372 = pneg %p171
        $region74: #{tpu_custom_call.1} parent=59 // pred_check_branch
          %374 = sbr.rel (%p372) target = $region76
        $region75: #{tpu_custom_call.1} parent=59 // pred_region
          %375 = dma.done [#allocation8], 512
        $region76: #{tpu_custom_call.1} parent=59 // pred_fallthru
          _
        %p376 = scmp.lt.s32.totalorder %s24, 3
        %s377 = scalar_select %p376, %s24, 3
        %s378 = smul.addr %s377, 8
        %s379 = scalar_lea.vmem %s0, %s378
        %p380 = pneg %p45
        %p381 = pneg %p42
        %p382 = pneg %p66
        %p383 = pneg %p63
        %p384 = pneg %p87
        %p385 = pneg %p84
        %p386 = pneg %p108
        %p387 = pneg %p105
        %p388 = pneg %p129
        %p389 = pneg %p126
        %p390 = pneg %p150
        %p391 = pneg %p147
        %p392 = pneg %p171
        %p393 = pneg %p168
        %p394 = pneg %p192
        %p395 = pneg %p189
        %p396 = pneg %p213
        %p397 = pneg %p210
        %p398 = pneg %p234
        %p399 = pneg %p231
        %p400 = pneg %p260
        %p401 = pneg %p257
        %p402 = scmp.lt.s32.totalorder %s24, 3
        %s403 = scalar_select %p402, %s24, 3
        %s404 = smul.addr %s403, 8
        %s405 = scalar_lea.vmem %s10, %s404
        %p406 = scmp.lt.s32.totalorder %s24, 3
        %s407 = scalar_select %p406, %s24, 3
        %s408 = smul.addr %s407, 8
        %s409 = scalar_lea.vmem %s0, %s408
        %p410 = scmp.lt.s32.totalorder %s24, 3
        %s411 = scalar_select %p410, %s24, 3
        %s412 = smul.addr %s411, 8
        %s413 = scalar_lea.vmem %s10, %s412
        %v414 = vld [vmem:[%s409] sm:$0xff]
        %416 = vrot.lane.b32.xlu0 %v414, 112
        %v417 = vpop.permute.xlu0 %416
        %v419 = vmul.f32 %v414, %v417
        %v420 = vld [vmem:[#allocation2] sm:$0xff]
        %v421 = vld [vmem:[#allocation2 + $0x8] sm:$0xff]
        %v422 = vld [vmem:[#allocation4] sm:$0xff]
        %v423 = vld [vmem:[#allocation4 + $0x8] sm:$0xff]
        %vm424 = vcmask 130048
        %v425 = vsel %vm424, %v417, 0
        %427 = vmatprep.subr.mxu0 0.0
        %428 = vmatpush1.msra.mxu0 %v422
        %429 = vmatprep.subr.mxu0 0.0
        %430 = vmatpush1.msra.mxu0 %v423
        %431 = vmatprep.subr.mxu0 0.0
        %432 = vmatpush1.msra.mxu0 0.0
        %433 = vmatprep.subr.mxu0 0.0
        %434 = vmatpush1.msra.mxu0 0.0
        %435 = vmatprep.subr.mxu0 0.0
        %436 = vmatpush1.msra.mxu0 0.0
        %437 = vmatprep.subr.mxu0 0.0
        %438 = vmatpush1.msra.mxu0 0.0
        %439 = vmatprep.subr.mxu0 0.0
        %440 = vmatpush1.msra.mxu0 0.0
        %441 = vmatprep.subr.mxu0 0.0
        %442 = vmatpush1.msra.mxu0 0.0
        %443 = vmatprep.subr.mxu0 0.0
        %444 = vmatpush1.msra.mxu0 0.0
        %445 = vmatprep.subr.mxu0 0.0
        %446 = vmatpush1.msra.mxu0 0.0
        %447 = vmatprep.subr.mxu0 0.0
        %448 = vmatpush1.msra.mxu0 0.0
        %449 = vmatprep.subr.mxu0 0.0
        %450 = vmatpush1.msra.mxu0 0.0
        %451 = vmatprep.subr.mxu0 0.0
        %452 = vmatpush1.msra.mxu0 0.0
        %453 = vmatprep.subr.mxu0 0.0
        %454 = vmatpush1.msra.mxu0 0.0
        %455 = vmatprep.subr.mxu0 0.0
        %456 = vmatpush1.msra.mxu0 0.0
        %457 = vmatprep.subr.mxu0 0.0
        %458 = vmatpush1.msra.mxu0 0.0
        %459 = vmatprep.subr.mxu0 0.0
        %460 = vmatpush1.msra.mxu0 0.0
        %461 = vmatprep.subr.mxu0 0.0
        %462 = vmatpush1.msra.mxu0 0.0
        %463 = vmatprep.subr.mxu0 0.0
        %464 = vmatpush1.msra.mxu0 0.0
        %465 = vmatprep.subr.mxu0 0.0
        %466 = vmatpush1.msra.mxu0 0.0
        %467 = vmatprep.subr.mxu0 0.0
        %468 = vmatpush1.msra.mxu0 0.0
        %469 = vmatprep.subr.mxu0 0.0
        %470 = vmatpush1.msra.mxu0 0.0
        %471 = vmatprep.subr.mxu0 0.0
        %472 = vmatpush1.msra.mxu0 0.0
        %473 = vmatprep.subr.mxu0 0.0
        %474 = vmatpush1.msra.mxu0 0.0
        %475 = vmatprep.subr.mxu0 0.0
        %476 = vmatpush1.msra.mxu0 0.0
        %477 = vmatprep.subr.mxu0 0.0
        %478 = vmatpush1.msra.mxu0 0.0
        %479 = vmatprep.subr.mxu0 0.0
        %480 = vmatpush1.msra.mxu0 0.0
        %481 = vmatprep.subr.mxu0 0.0
        %482 = vmatpush1.msra.mxu0 0.0
        %483 = vmatprep.subr.mxu0 0.0
        %484 = vmatpush1.msra.mxu0 0.0
        %485 = vmatprep.subr.mxu0 0.0
        %486 = vmatpush1.msra.mxu0 0.0
        %487 = vmatprep.subr.mxu0 0.0
        %488 = vmatpush1.msra.mxu0 0.0
        %489 = vmatprep.subr.mxu0 0.0
        %490 = vmatpush1.msra.mxu0 0.0
        %491 = vmatprep.mubr.f32.mxu0 0.0
        %492 = vmatmul.mubr.f32.gmra.mrb[0].mxu0 %v425
        %v493 = vpop.f32.mrb[0].mxu0
        %v494 = vadd.f32 0.0, %v493
        %v495 = vpop.f32.mrb[0].mxu0
        %496 = vdwg.mxu0
        %v498 = vsel %vm424, %v419, 0
        %500 = vmatprep.subr.mxu0 0.0
        %501 = vmatpush1.msra.mxu0 %v420
        %502 = vmatprep.subr.mxu0 0.0
        %503 = vmatpush1.msra.mxu0 %v421
        %504 = vmatprep.subr.mxu0 0.0
        %505 = vmatpush1.msra.mxu0 0.0
        %506 = vmatprep.subr.mxu0 0.0
        %507 = vmatpush1.msra.mxu0 0.0
        %508 = vmatprep.subr.mxu0 0.0
        %509 = vmatpush1.msra.mxu0 0.0
        %510 = vmatprep.subr.mxu0 0.0
        %511 = vmatpush1.msra.mxu0 0.0
        %512 = vmatprep.subr.mxu0 0.0
        %513 = vmatpush1.msra.mxu0 0.0
        %514 = vmatprep.subr.mxu0 0.0
        %515 = vmatpush1.msra.mxu0 0.0
        %516 = vmatprep.subr.mxu0 0.0
        %517 = vmatpush1.msra.mxu0 0.0
        %518 = vmatprep.subr.mxu0 0.0
        %519 = vmatpush1.msra.mxu0 0.0
        %520 = vmatprep.subr.mxu0 0.0
        %521 = vmatpush1.msra.mxu0 0.0
        %522 = vmatprep.subr.mxu0 0.0
        %523 = vmatpush1.msra.mxu0 0.0
        %524 = vmatprep.subr.mxu0 0.0
        %525 = vmatpush1.msra.mxu0 0.0
        %526 = vmatprep.subr.mxu0 0.0
        %527 = vmatpush1.msra.mxu0 0.0
        %528 = vmatprep.subr.mxu0 0.0
        %529 = vmatpush1.msra.mxu0 0.0
        %530 = vmatprep.subr.mxu0 0.0
        %531 = vmatpush1.msra.mxu0 0.0
        %532 = vmatprep.subr.mxu0 0.0
        %533 = vmatpush1.msra.mxu0 0.0
        %534 = vmatprep.subr.mxu0 0.0
        %535 = vmatpush1.msra.mxu0 0.0
        %536 = vmatprep.subr.mxu0 0.0
        %537 = vmatpush1.msra.mxu0 0.0
        %538 = vmatprep.subr.mxu0 0.0
        %539 = vmatpush1.msra.mxu0 0.0
        %540 = vmatprep.subr.mxu0 0.0
        %541 = vmatpush1.msra.mxu0 0.0
        %542 = vmatprep.subr.mxu0 0.0
        %543 = vmatpush1.msra.mxu0 0.0
        %544 = vmatprep.subr.mxu0 0.0
        %545 = vmatpush1.msra.mxu0 0.0
        %546 = vmatprep.subr.mxu0 0.0
        %547 = vmatpush1.msra.mxu0 0.0
        %548 = vmatprep.subr.mxu0 0.0
        %549 = vmatpush1.msra.mxu0 0.0
        %550 = vmatprep.subr.mxu0 0.0
        %551 = vmatpush1.msra.mxu0 0.0
        %552 = vmatprep.subr.mxu0 0.0
        %553 = vmatpush1.msra.mxu0 0.0
        %554 = vmatprep.subr.mxu0 0.0
        %555 = vmatpush1.msra.mxu0 0.0
        %556 = vmatprep.subr.mxu0 0.0
        %557 = vmatpush1.msra.mxu0 0.0
        %558 = vmatprep.subr.mxu0 0.0
        %559 = vmatpush1.msra.mxu0 0.0
        %560 = vmatprep.subr.mxu0 0.0
        %561 = vmatpush1.msra.mxu0 0.0
        %562 = vmatprep.subr.mxu0 0.0
        %563 = vmatpush1.msra.mxu0 0.0
        %564 = vmatprep.mubr.f32.mxu0 0.0
        %565 = vmatmul.mubr.f32.gmra.mrb[0].mxu0 %v498
        %v566 = vpop.f32.mrb[0].mxu0
        %v567 = vadd.f32 %v494, %v566
        %v568 = vpop.f32.mrb[0].mxu0
        %569 = vdwg.mxu0
        %v570 = vld [vmem:[%s3] sm:$0x1]
        %v572 = vlaneseq
        %v573 = vshrl.u32 %v572, 7
        %v574 = vsub.s32 0, %v573
        %v575 = vrot.slane %v570, %v574
        %v577 = vadd.f32 %v567, %v575
        %v578 = vmax.f32 %v577, 0.0
        %v579 = vld [vmem:[#allocation6] sm:$0xff]
        %v580 = vld [vmem:[#allocation6 + $0x8] sm:$0xff]
        %v581 = vld [vmem:[#allocation6 + $0x10] sm:$0xff]
        %v582 = vld [vmem:[#allocation6 + $0x18] sm:$0xff]
        %v583 = vld [vmem:[%s5] sm:$0x1]
        %v585 = vlaneseq
        %v586 = vshrl.u32 %v585, 7
        %v587 = vsub.s32 0, %v586
        %v588 = vrot.slane %v583, %v587
        %vm590 = vcmask 261120
        %v592 = vsel %vm590, %v578, 0
        %594 = vmatprep.subr.mxu0 0.0
        %595 = vmatpush1.msra.mxu0 %v579
        %596 = vmatprep.subr.mxu0 0.0
        %597 = vmatpush1.msra.mxu0 %v580
        %598 = vmatprep.subr.mxu0 0.0
        %599 = vmatpush1.msra.mxu0 %v581
        %600 = vmatprep.subr.mxu0 0.0
        %601 = vmatpush1.msra.mxu0 %v582
        %602 = vmatprep.subr.mxu0 0.0
        %603 = vmatpush1.msra.mxu0 0.0
        %604 = vmatprep.subr.mxu0 0.0
        %605 = vmatpush1.msra.mxu0 0.0
        %606 = vmatprep.subr.mxu0 0.0
        %607 = vmatpush1.msra.mxu0 0.0
        %608 = vmatprep.subr.mxu0 0.0
        %609 = vmatpush1.msra.mxu0 0.0
        %610 = vmatprep.subr.mxu0 0.0
        %611 = vmatpush1.msra.mxu0 0.0
        %612 = vmatprep.subr.mxu0 0.0
        %613 = vmatpush1.msra.mxu0 0.0
        %614 = vmatprep.subr.mxu0 0.0
        %615 = vmatpush1.msra.mxu0 0.0
        %616 = vmatprep.subr.mxu0 0.0
        %617 = vmatpush1.msra.mxu0 0.0
        %618 = vmatprep.subr.mxu0 0.0
        %619 = vmatpush1.msra.mxu0 0.0
        %620 = vmatprep.subr.mxu0 0.0
        %621 = vmatpush1.msra.mxu0 0.0
        %622 = vmatprep.subr.mxu0 0.0
        %623 = vmatpush1.msra.mxu0 0.0
        %624 = vmatprep.subr.mxu0 0.0
        %625 = vmatpush1.msra.mxu0 0.0
        %626 = vmatprep.subr.mxu0 0.0
        %627 = vmatpush1.msra.mxu0 0.0
        %628 = vmatprep.subr.mxu0 0.0
        %629 = vmatpush1.msra.mxu0 0.0
        %630 = vmatprep.subr.mxu0 0.0
        %631 = vmatpush1.msra.mxu0 0.0
        %632 = vmatprep.subr.mxu0 0.0
        %633 = vmatpush1.msra.mxu0 0.0
        %634 = vmatprep.subr.mxu0 0.0
        %635 = vmatpush1.msra.mxu0 0.0
        %636 = vmatprep.subr.mxu0 0.0
        %637 = vmatpush1.msra.mxu0 0.0
        %638 = vmatprep.subr.mxu0 0.0
        %639 = vmatpush1.msra.mxu0 0.0
        %640 = vmatprep.subr.mxu0 0.0
        %641 = vmatpush1.msra.mxu0 0.0
        %642 = vmatprep.subr.mxu0 0.0
        %643 = vmatpush1.msra.mxu0 0.0
        %644 = vmatprep.subr.mxu0 0.0
        %645 = vmatpush1.msra.mxu0 0.0
        %646 = vmatprep.subr.mxu0 0.0
        %647 = vmatpush1.msra.mxu0 0.0
        %648 = vmatprep.subr.mxu0 0.0
        %649 = vmatpush1.msra.mxu0 0.0
        %650 = vmatprep.subr.mxu0 0.0
        %651 = vmatpush1.msra.mxu0 0.0
        %652 = vmatprep.subr.mxu0 0.0
        %653 = vmatpush1.msra.mxu0 0.0
        %654 = vmatprep.subr.mxu0 0.0
        %655 = vmatpush1.msra.mxu0 0.0
        %656 = vmatprep.subr.mxu0 0.0
        %657 = vmatpush1.msra.mxu0 0.0
        %658 = vmatprep.mubr.f32.mxu0 0.0
        %659 = vmatmul.mubr.f32.gmra.mrb[0].mxu0 %v592
        %v660 = vpop.f32.mrb[0].mxu0
        %v661 = vadd.f32 %v588, %v660
        %v662 = vpop.f32.mrb[0].mxu0
        %663 = vdwg.mxu0
        %v664 = vmax.f32 %v661, 0.0
        %v665 = vld [vmem:[#allocation7] sm:$0xff]
        %v666 = vld [vmem:[#allocation7 + $0x8] sm:$0xff]
        %v667 = vld [vmem:[#allocation7 + $0x10] sm:$0xff]
        %v668 = vld [vmem:[#allocation7 + $0x18] sm:$0xff]
        %v669 = vld [vmem:[%s7] sm:$0x1]
        %v671 = vlaneseq
        %v672 = vshrl.u32 %v671, 7
        %v673 = vsub.s32 0, %v672
        %v674 = vrot.slane %v669, %v673
        %v677 = vsel %vm590, %v664, 0
        %679 = vmatprep.subr.mxu0 0.0
        %680 = vmatpush1.msra.mxu0 %v665
        %681 = vmatprep.subr.mxu0 0.0
        %682 = vmatpush1.msra.mxu0 %v666
        %683 = vmatprep.subr.mxu0 0.0
        %684 = vmatpush1.msra.mxu0 %v667
        %685 = vmatprep.subr.mxu0 0.0
        %686 = vmatpush1.msra.mxu0 %v668
        %687 = vmatprep.subr.mxu0 0.0
        %688 = vmatpush1.msra.mxu0 0.0
        %689 = vmatprep.subr.mxu0 0.0
        %690 = vmatpush1.msra.mxu0 0.0
        %691 = vmatprep.subr.mxu0 0.0
        %692 = vmatpush1.msra.mxu0 0.0
        %693 = vmatprep.subr.mxu0 0.0
        %694 = vmatpush1.msra.mxu0 0.0
        %695 = vmatprep.subr.mxu0 0.0
        %696 = vmatpush1.msra.mxu0 0.0
        %697 = vmatprep.subr.mxu0 0.0
        %698 = vmatpush1.msra.mxu0 0.0
        %699 = vmatprep.subr.mxu0 0.0
        %700 = vmatpush1.msra.mxu0 0.0
        %701 = vmatprep.subr.mxu0 0.0
        %702 = vmatpush1.msra.mxu0 0.0
        %703 = vmatprep.subr.mxu0 0.0
        %704 = vmatpush1.msra.mxu0 0.0
        %705 = vmatprep.subr.mxu0 0.0
        %706 = vmatpush1.msra.mxu0 0.0
        %707 = vmatprep.subr.mxu0 0.0
        %708 = vmatpush1.msra.mxu0 0.0
        %709 = vmatprep.subr.mxu0 0.0
        %710 = vmatpush1.msra.mxu0 0.0
        %711 = vmatprep.subr.mxu0 0.0
        %712 = vmatpush1.msra.mxu0 0.0
        %713 = vmatprep.subr.mxu0 0.0
        %714 = vmatpush1.msra.mxu0 0.0
        %715 = vmatprep.subr.mxu0 0.0
        %716 = vmatpush1.msra.mxu0 0.0
        %717 = vmatprep.subr.mxu0 0.0
        %718 = vmatpush1.msra.mxu0 0.0
        %719 = vmatprep.subr.mxu0 0.0
        %720 = vmatpush1.msra.mxu0 0.0
        %721 = vmatprep.subr.mxu0 0.0
        %722 = vmatpush1.msra.mxu0 0.0
        %723 = vmatprep.subr.mxu0 0.0
        %724 = vmatpush1.msra.mxu0 0.0
        %725 = vmatprep.subr.mxu0 0.0
        %726 = vmatpush1.msra.mxu0 0.0
        %727 = vmatprep.subr.mxu0 0.0
        %728 = vmatpush1.msra.mxu0 0.0
        %729 = vmatprep.subr.mxu0 0.0
        %730 = vmatpush1.msra.mxu0 0.0
        %731 = vmatprep.subr.mxu0 0.0
        %732 = vmatpush1.msra.mxu0 0.0
        %733 = vmatprep.subr.mxu0 0.0
        %734 = vmatpush1.msra.mxu0 0.0
        %735 = vmatprep.subr.mxu0 0.0
        %736 = vmatpush1.msra.mxu0 0.0
        %737 = vmatprep.subr.mxu0 0.0
        %738 = vmatpush1.msra.mxu0 0.0
        %739 = vmatprep.subr.mxu0 0.0
        %740 = vmatpush1.msra.mxu0 0.0
        %741 = vmatprep.subr.mxu0 0.0
        %742 = vmatpush1.msra.mxu0 0.0
        %743 = vmatprep.mubr.f32.mxu0 0.0
        %744 = vmatmul.mubr.f32.gmra.mrb[0].mxu0 %v677
        %v745 = vpop.f32.mrb[0].mxu0
        %v746 = vadd.f32 %v674, %v745
        %v747 = vpop.f32.mrb[0].mxu0
        %748 = vdwg.mxu0
        %v749 = vmax.f32 %v746, 0.0
        %v750 = vld [vmem:[%s8] sm:$0xff]
        %v751 = vld [vmem:[%s8 + $0x8] sm:$0xff]
        %v752 = vld [vmem:[%s8 + $0x10] sm:$0xff]
        %v753 = vld [vmem:[%s8 + $0x18] sm:$0xff]
        %v754 = vld [vmem:[%s9] sm:$0x1]
        %v756 = vlaneseq
        %v757 = vshrl.u32 %v756, 7
        %v758 = vsub.s32 0, %v757
        %v759 = vrot.slane %v754, %v758
        %v762 = vsel %vm590, %v749, 0
        %764 = vmatprep.subr.mxu0 0.0
        %765 = vmatpush1.msra.mxu0 %v750
        %766 = vmatprep.subr.mxu0 0.0
        %767 = vmatpush1.msra.mxu0 %v751
        %768 = vmatprep.subr.mxu0 0.0
        %769 = vmatpush1.msra.mxu0 %v752
        %770 = vmatprep.subr.mxu0 0.0
        %771 = vmatpush1.msra.mxu0 %v753
        %772 = vmatprep.subr.mxu0 0.0
        %773 = vmatpush1.msra.mxu0 0.0
        %774 = vmatprep.subr.mxu0 0.0
        %775 = vmatpush1.msra.mxu0 0.0
        %776 = vmatprep.subr.mxu0 0.0
        %777 = vmatpush1.msra.mxu0 0.0
        %778 = vmatprep.subr.mxu0 0.0
        %779 = vmatpush1.msra.mxu0 0.0
        %780 = vmatprep.subr.mxu0 0.0
        %781 = vmatpush1.msra.mxu0 0.0
        %782 = vmatprep.subr.mxu0 0.0
        %783 = vmatpush1.msra.mxu0 0.0
        %784 = vmatprep.subr.mxu0 0.0
        %785 = vmatpush1.msra.mxu0 0.0
        %786 = vmatprep.subr.mxu0 0.0
        %787 = vmatpush1.msra.mxu0 0.0
        %788 = vmatprep.subr.mxu0 0.0
        %789 = vmatpush1.msra.mxu0 0.0
        %790 = vmatprep.subr.mxu0 0.0
        %791 = vmatpush1.msra.mxu0 0.0
        %792 = vmatprep.subr.mxu0 0.0
        %793 = vmatpush1.msra.mxu0 0.0
        %794 = vmatprep.subr.mxu0 0.0
        %795 = vmatpush1.msra.mxu0 0.0
        %796 = vmatprep.subr.mxu0 0.0
        %797 = vmatpush1.msra.mxu0 0.0
        %798 = vmatprep.subr.mxu0 0.0
        %799 = vmatpush1.msra.mxu0 0.0
        %800 = vmatprep.subr.mxu0 0.0
        %801 = vmatpush1.msra.mxu0 0.0
        %802 = vmatprep.subr.mxu0 0.0
        %803 = vmatpush1.msra.mxu0 0.0
        %804 = vmatprep.subr.mxu0 0.0
        %805 = vmatpush1.msra.mxu0 0.0
        %806 = vmatprep.subr.mxu0 0.0
        %807 = vmatpush1.msra.mxu0 0.0
        %808 = vmatprep.subr.mxu0 0.0
        %809 = vmatpush1.msra.mxu0 0.0
        %810 = vmatprep.subr.mxu0 0.0
        %811 = vmatpush1.msra.mxu0 0.0
        %812 = vmatprep.subr.mxu0 0.0
        %813 = vmatpush1.msra.mxu0 0.0
        %814 = vmatprep.subr.mxu0 0.0
        %815 = vmatpush1.msra.mxu0 0.0
        %816 = vmatprep.subr.mxu0 0.0
        %817 = vmatpush1.msra.mxu0 0.0
        %818 = vmatprep.subr.mxu0 0.0
        %819 = vmatpush1.msra.mxu0 0.0
        %820 = vmatprep.subr.mxu0 0.0
        %821 = vmatpush1.msra.mxu0 0.0
        %822 = vmatprep.subr.mxu0 0.0
        %823 = vmatpush1.msra.mxu0 0.0
        %824 = vmatprep.subr.mxu0 0.0
        %825 = vmatpush1.msra.mxu0 0.0
        %826 = vmatprep.subr.mxu0 0.0
        %827 = vmatpush1.msra.mxu0 0.0
        %828 = vmatprep.mubr.f32.mxu0 0.0
        %829 = vmatmul.mubr.f32.gmra.mrb[0].mxu0 %v762
        %v830 = vpop.f32.mrb[0].mxu0
        %v831 = vadd.f32 %v759, %v830
        %v832 = vpop.f32.mrb[0].mxu0
        %833 = vdwg.mxu0
        %vm834 = vcmask 31744
        %835 = vst.msk [vmem:[%s413] sm:$0xff] %vm834, %v831
        %p836 = scmp.lt.s32.totalorder %s24, 3
        %s837 = scalar_select %p836, %s24, 3
        %s838 = smul.addr %s837, 8
        %s839 = scalar_lea.vmem %s10, %s838
        // Predicated region
        $region77: #{tpu_custom_call.1} parent=59 // pred_check
          %p840 = pneg %p257
        $region78: #{tpu_custom_call.1} parent=59 // pred_check_branch
          %842 = sbr.rel (%p840) target = $region80
        $region79: #{tpu_custom_call.1} parent=59 // pred_region
          _
        $region80: #{tpu_custom_call.1} parent=59 // pred_fallthru
          _
      $region60: #{tpu_custom_call.1} parent=5 // pred_fallthru
        _
      %p843 = scmp.le.s32.totalorder 2, %s19
      // Predicated region
      $region81: #{tpu_custom_call.1} parent=5 // pred_check
        %p844 = pneg %p843
      $region82: #{tpu_custom_call.1} parent=5 // pred_check_branch
        %846 = sbr.rel (%p844) target = $region84
      $region83: #{tpu_custom_call.1} parent=5 // pred_region
        %s847 = ssub.s32 %s19, 2
        // Predicated region
        $region85: #{tpu_custom_call.1} parent=83 // pred_check
          %p848 = pneg %p263
        $region86: #{tpu_custom_call.1} parent=83 // pred_check_branch
          %850 = sbr.rel (%p848) target = $region88
        $region87: #{tpu_custom_call.1} parent=83 // pred_region
          %p851 = scmp.lt.s32.totalorder %s25, 3
          %s852 = scalar_select %p851, %s25, 3
          %s853 = smul.addr %s852, 8
          %s854 = scalar_lea.vmem %s10, %s853
        $region88: #{tpu_custom_call.1} parent=83 // pred_fallthru
          _
      $region84: #{tpu_custom_call.1} parent=5 // pred_fallthru
        _
    $region6: #{tpu_custom_call.1} parent=1 // loop_footer
      %s23 = sadd.s32 1, %s19
    $region7: #{tpu_custom_call.1} parent=1 // loop_footer_branch
      %18 = sbr.rel target = $region3
    $region8: #{tpu_custom_call.1} parent=1 // loop_exit
      _
    %855 = vsyncpa [#allocation3], 1
    %s856 = scalar_lea.sflag [#allocation3], 1
    %857 = vsyncpa %s856, 1
    %858 = vsyncpa [#allocation5], 1
    %859 = vsyncpa [#allocation8], 1

</llo_original>
